<compile_context>
chip_gen: v5e
topology: v5e:2x2
jax: 0.10.0
libtpu: 0.0.40
codegen_flags: <defaults>
</compile_context>

<pallas_src>
import jax
import jax.numpy as jnp
import numpy as np
from jax import lax
from jax.experimental import pallas as pl
from jax.experimental.pallas import tpu as pltpu

# ----- model hyperparameters (from the PyTorch script) -----
N_EMBED = 32
BLOCK_SIZE = 8
N_HEAD = 4
HEAD_SIZE = N_EMBED // N_HEAD
VP = 128  # lane-dense padded projection width (>= N_EMBED)


# ---------------------------------------------------------------------------
# Pallas kernel: one batch chunk (Bt, T, C) per grid step.
# ---------------------------------------------------------------------------
def _mha_kernel(x_ref, wqkv_ref, wproj_ref, bproj_ref, out_ref):
    Bt, T, C = x_ref.shape
    H, D = N_HEAD, HEAD_SIZE
    # torch module scales by n_embed ** -0.5 (C, not head_size).
    scale = jnp.float32(1.0 / (C ** 0.5))

    # ---- fused QKV projection on flattened rows: (Bt*T, C) @ (C, 3C) ----
    x2 = x_ref[...].reshape(Bt * T, C)                       # bf16
    qkv = jnp.dot(x2, wqkv_ref[...],
                  preferred_element_type=jnp.float32)        # (Bt*T, 3C) f32
    qkv = qkv.reshape(Bt, T, 3 * C)

    # causal mask (broadcast over batch)
    row = lax.broadcasted_iota(jnp.int32, (T, T), 0)
    col = lax.broadcasted_iota(jnp.int32, (T, T), 1)
    causal = (col <= row)[None, :, :]                        # (1, T, T)

    # ---- per-head causal attention, batched over the Bt axis ----
    head_outs = []
    for h in range(H):
        qh = qkv[:, :, h * D:(h + 1) * D].astype(jnp.bfloat16)           # (Bt,T,D)
        kh = qkv[:, :, C + h * D:C + (h + 1) * D].astype(jnp.bfloat16)
        vh = qkv[:, :, 2 * C + h * D:2 * C + (h + 1) * D].astype(jnp.bfloat16)
        s = jnp.einsum("bqd,bkd->bqk", qh, kh,
                       preferred_element_type=jnp.float32) * scale       # (Bt,T,T)
        s = jnp.where(causal, s, -jnp.inf)
        p = jax.nn.softmax(s, axis=-1)                                   # f32
        head_outs.append(
            jnp.einsum("bqk,bkd->bqd", p.astype(jnp.bfloat16), vh,
                       preferred_element_type=jnp.float32))              # (Bt,T,D)
    sa = jnp.concatenate(head_outs, axis=-1)                 # (Bt, T, C) f32

    # ---- output projection (padded to VP=128 lanes for unmasked stores) ----
    sa2 = sa.reshape(Bt * T, C).astype(jnp.bfloat16)
    y = jnp.dot(sa2, wproj_ref[...],
                preferred_element_type=jnp.float32) + bproj_ref[...]     # (Bt*T, VP)
    out_ref[...] = y.reshape(Bt, T, out_ref.shape[-1])


# ---------------------------------------------------------------------------
# Wrapper: weight fusion / padding, BlockSpecs, batch chunking.
# ---------------------------------------------------------------------------
def multi_head_attention(x, params, *, block_b=128):
    B, T, C = x.shape
    assert C == N_EMBED and T == BLOCK_SIZE

    Bt = min(B, block_b)
    n_blocks = pl.cdiv(B, Bt)
    Bp = n_blocks * Bt
    if Bp != B:  # pad batch up to a multiple of the block size
        x = jnp.concatenate([x, jnp.zeros((Bp - B, T, C), x.dtype)], axis=0)

    # fused QKV weight (C, 3C); projection weight zero-padded to 128 lanes
    wqkv = jnp.concatenate([params["wq"], params["wk"], params["wv"]],
                           axis=1).astype(jnp.bfloat16)                   # (C, 3C)
    wproj = jnp.zeros((C, VP), jnp.float32).at[:, :C].set(
        params["wproj"]).astype(jnp.bfloat16)                             # (C, VP)
    bproj = jnp.zeros((1, VP), jnp.float32).at[:, :C].set(
        params["bproj"][None, :])                                         # (1, VP) f32
    x_bf = x.astype(jnp.bfloat16)

    out = pl.pallas_call(
        _mha_kernel,
        out_shape=jax.ShapeDtypeStruct((Bp, T, VP), jnp.float32),
        grid=(n_blocks,),
        in_specs=[
            pl.BlockSpec((Bt, T, C), lambda b: (b, 0, 0)),   # activations
            pl.BlockSpec((C, 3 * C), lambda b: (0, 0)),      # fused QKV weight
            pl.BlockSpec((C, VP), lambda b: (0, 0)),         # padded proj weight
            pl.BlockSpec((1, VP), lambda b: (0, 0)),         # padded proj bias
        ],
        out_specs=pl.BlockSpec((Bt, T, VP), lambda b: (b, 0, 0)),
        compiler_params=pltpu.CompilerParams(
            dimension_semantics=("parallel",)),
    )(x_bf, wqkv, wproj, bproj)

    return out[:B, :, :C]


# ---------------------------------------------------------------------------
# Deterministic parameter init (math layout: (in_dim, out_dim); columns
# h*D:(h+1)*D of wq/wk/wv are head h's query/key/value weights).
# ---------------------------------------------------------------------------
def init_params(key):
    C = N_EMBED
    ks = jax.random.split(key, 5)
    bound = 1.0 / np.sqrt(C)

    def unif(k, shape):
        return jax.random.uniform(k, shape, jnp.float32, -bound, bound)

    return {
        "wq": unif(ks[0], (C, C)),
        "wk": unif(ks[1], (C, C)),
        "wv": unif(ks[2], (C, C)),
        "wproj": unif(ks[3], (C, C)),
        "bproj": unif(ks[4], (C,)),
    }


# ---------------------------------------------------------------------------
# Pure-JAX reference (mirrors the PyTorch forward exactly, f32).
# ---------------------------------------------------------------------------
def reference_forward(x, p):
    B, T, C = x.shape
    D = HEAD_SIZE
    scale = C ** (-0.5)
    mask = jnp.tril(jnp.ones((T, T), dtype=bool))
    heads = []
    for h in range(N_HEAD):
        q = x @ p["wq"][:, h * D:(h + 1) * D]
        k = x @ p["wk"][:, h * D:(h + 1) * D]
        v = x @ p["wv"][:, h * D:(h + 1) * D]
        wei = jnp.einsum("btd,bsd->bts", q, k) * scale
        wei = jnp.where(mask, wei, -jnp.inf)
        wei = jax.nn.softmax(wei, axis=-1)
        heads.append(jnp.einsum("bts,bsd->btd", wei, v))
    return jnp.concatenate(heads, axis=-1) @ p["wproj"] + p["bproj"]


if __name__ == "__main__":
    key = jax.random.PRNGKey(0)
    kx, kp = jax.random.split(key)
    params = init_params(kp)

    B, T = 2, BLOCK_SIZE
    x = jax.random.normal(kx, (B, T, N_EMBED), dtype=jnp.float32)

    out = jax.block_until_ready(multi_head_attention(x, params))
    ref = jax.block_until_ready(reference_forward(x, params))

    assert out.shape == (B, T, N_EMBED), out.shape
    # kernel uses bf16 matmul operands with f32 accumulation -> ~1% tolerance
    np.testing.assert_allclose(np.asarray(out), np.asarray(ref),
                               rtol=2e-2, atol=2e-2)
    print("KERNEL_OK")
</pallas_src>

<mosaic_0001>
module attributes {stable_mosaic.version = 11 : i64} {
  func.func @_mha_kernel(%arg0: i32, %arg1: memref<2x8x32xbf16, #tpu.memory_space<vmem>>, %arg2: memref<32x96xbf16, #tpu.memory_space<vmem>>, %arg3: memref<32x128xbf16, #tpu.memory_space<vmem>>, %arg4: memref<1x128xf32, #tpu.memory_space<vmem>>, %arg5: memref<2x8x128xf32, #tpu.memory_space<vmem>>) attributes {dimension_semantics = [#tpu.dimension_semantics<parallel>], iteration_bounds = array<i64: 1>, scalar_prefetch = 0 : i64, scratch_operands = 0 : i64, tpu.core_type = #tpu.core_type<tc>, window_params = [{transform_indices = @transform_0, window_bounds = array<i64: 2, 8, 32>}, {pipeline_mode = #tpu.pipeline_mode<synchronous>, transform_indices = @transform_1, window_bounds = array<i64: 32, 96>}, {pipeline_mode = #tpu.pipeline_mode<synchronous>, transform_indices = @transform_2, window_bounds = array<i64: 32, 128>}, {pipeline_mode = #tpu.pipeline_mode<synchronous>, transform_indices = @transform_3, window_bounds = array<i64: 1, 128>}, {transform_indices = @transform_4, window_bounds = array<i64: 2, 8, 128>}]} {
    %c0 = arith.constant 0 : index
    %c0_0 = arith.constant 0 : index
    %c0_1 = arith.constant 0 : index
    %0 = vector.load %arg1[%c0, %c0_0, %c0_1] : memref<2x8x32xbf16, #tpu.memory_space<vmem>>, vector<2x8x32xbf16>
    %1 = vector.shape_cast %0 : vector<2x8x32xbf16> to vector<16x32xbf16>
    %c0_2 = arith.constant 0 : index
    %c0_3 = arith.constant 0 : index
    %2 = vector.load %arg2[%c0_2, %c0_3] : memref<32x96xbf16, #tpu.memory_space<vmem>>, vector<32x96xbf16>
    %cst = arith.constant dense<0.000000e+00> : vector<16x96xf32>
    %3 = tpu.matmul %1, %2, %cst {dimension_numbers = #tpu.dot_dimension_numbers<[1], [0], [0], [1], [0, 0, 1, 1], [], []>} : vector<16x32xbf16>, vector<32x96xbf16>, vector<16x96xf32> -> vector<16x96xf32>
    %4 = vector.shape_cast %3 : vector<16x96xf32> to vector<2x8x96xf32>
    %5 = tpu.iota {dimensions = array<i32: 0>} : vector<8x8xi32>
    %6 = tpu.iota {dimensions = array<i32: 1>} : vector<8x8xi32>
    %7 = arith.cmpi sle, %6, %5 : vector<8x8xi32>
    %8 = vector.shape_cast %7 : vector<8x8xi1> to vector<1x8x8xi1>
    %9 = vector.extract_strided_slice %4 {offsets = [0, 0, 0], sizes = [2, 8, 8], strides = [1, 1, 1]} : vector<2x8x96xf32> to vector<2x8x8xf32>
    %10 = arith.truncf %9 : vector<2x8x8xf32> to vector<2x8x8xbf16>
    %11 = vector.extract_strided_slice %4 {offsets = [0, 0, 32], sizes = [2, 8, 8], strides = [1, 1, 1]} : vector<2x8x96xf32> to vector<2x8x8xf32>
    %12 = arith.truncf %11 : vector<2x8x8xf32> to vector<2x8x8xbf16>
    %13 = vector.extract_strided_slice %4 {offsets = [0, 0, 64], sizes = [2, 8, 8], strides = [1, 1, 1]} : vector<2x8x96xf32> to vector<2x8x8xf32>
    %14 = arith.truncf %13 : vector<2x8x8xf32> to vector<2x8x8xbf16>
    "tpu.trace_start"() <{level = 10 : i32, message = "bqd,bkd->bqk"}> : () -> ()
    %cst_4 = arith.constant dense<0.000000e+00> : vector<2x8x8xf32>
    %15 = tpu.matmul %10, %12, %cst_4 {dimension_numbers = #tpu.dot_dimension_numbers<[2], [2], [1], [1], [0, 0, 0, 1, 1, 1], [0], [0]>} : vector<2x8x8xbf16>, vector<2x8x8xbf16>, vector<2x8x8xf32> -> vector<2x8x8xf32>
    "tpu.trace_stop"() : () -> ()
    %cst_5 = arith.constant 0.176776692 : f32
    %16 = vector.broadcast %cst_5 : f32 to vector<2x8x8xf32>
    %17 = arith.mulf %15, %16 : vector<2x8x8xf32>
    %cst_6 = arith.constant 0xFF800000 : f32
    %18 = vector.shape_cast %8 : vector<1x8x8xi1> to vector<1x8x8xi1>
    %19 = vector.broadcast %18 : vector<1x8x8xi1> to vector<2x8x8xi1>
    %20 = vector.broadcast %cst_6 : f32 to vector<2x8x8xf32>
    %21 = arith.select %19, %17, %20 : vector<2x8x8xi1>, vector<2x8x8xf32>
    %cst_7 = arith.constant dense<0xFF800000> : vector<2x8xf32>
    %22 = vector.multi_reduction <maximumf>, %21, %cst_7 [2] : vector<2x8x8xf32> to vector<2x8xf32>
    %cst_8 = arith.constant 0xFF800000 : f32
    %23 = vector.broadcast %cst_8 : f32 to vector<2x8xf32>
    %24 = arith.maximumf %23, %22 : vector<2x8xf32>
    %25 = vector.shape_cast %24 : vector<2x8xf32> to vector<2x8x1xf32>
    %26 = vector.broadcast %25 : vector<2x8x1xf32> to vector<2x8x8xf32>
    %27 = arith.subf %21, %26 : vector<2x8x8xf32>
    %28 = math.exp %27 : vector<2x8x8xf32>
    %cst_9 = arith.constant dense<0.000000e+00> : vector<2x8xf32>
    %29 = vector.multi_reduction <add>, %28, %cst_9 [2] : vector<2x8x8xf32> to vector<2x8xf32>
    %30 = vector.shape_cast %29 : vector<2x8xf32> to vector<2x8x1xf32>
    %31 = vector.broadcast %30 : vector<2x8x1xf32> to vector<2x8x8xf32>
    %32 = arith.divf %28, %31 : vector<2x8x8xf32>
    %33 = arith.truncf %32 : vector<2x8x8xf32> to vector<2x8x8xbf16>
    "tpu.trace_start"() <{level = 10 : i32, message = "bqk,bkd->bqd"}> : () -> ()
    %cst_10 = arith.constant dense<0.000000e+00> : vector<2x8x8xf32>
    %34 = tpu.matmul %33, %14, %cst_10 {dimension_numbers = #tpu.dot_dimension_numbers<[2], [1], [1], [2], [0, 0, 0, 1, 1, 2], [0], [0]>} : vector<2x8x8xbf16>, vector<2x8x8xbf16>, vector<2x8x8xf32> -> vector<2x8x8xf32>
    "tpu.trace_stop"() : () -> ()
    %35 = vector.extract_strided_slice %4 {offsets = [0, 0, 8], sizes = [2, 8, 8], strides = [1, 1, 1]} : vector<2x8x96xf32> to vector<2x8x8xf32>
    %36 = arith.truncf %35 : vector<2x8x8xf32> to vector<2x8x8xbf16>
    %37 = vector.extract_strided_slice %4 {offsets = [0, 0, 40], sizes = [2, 8, 8], strides = [1, 1, 1]} : vector<2x8x96xf32> to vector<2x8x8xf32>
    %38 = arith.truncf %37 : vector<2x8x8xf32> to vector<2x8x8xbf16>
    %39 = vector.extract_strided_slice %4 {offsets = [0, 0, 72], sizes = [2, 8, 8], strides = [1, 1, 1]} : vector<2x8x96xf32> to vector<2x8x8xf32>
    %40 = arith.truncf %39 : vector<2x8x8xf32> to vector<2x8x8xbf16>
    "tpu.trace_start"() <{level = 10 : i32, message = "bqd,bkd->bqk"}> : () -> ()
    %cst_11 = arith.constant dense<0.000000e+00> : vector<2x8x8xf32>
    %41 = tpu.matmul %36, %38, %cst_11 {dimension_numbers = #tpu.dot_dimension_numbers<[2], [2], [1], [1], [0, 0, 0, 1, 1, 1], [0], [0]>} : vector<2x8x8xbf16>, vector<2x8x8xbf16>, vector<2x8x8xf32> -> vector<2x8x8xf32>
    "tpu.trace_stop"() : () -> ()
    %cst_12 = arith.constant 0.176776692 : f32
    %42 = vector.broadcast %cst_12 : f32 to vector<2x8x8xf32>
    %43 = arith.mulf %41, %42 : vector<2x8x8xf32>
    %cst_13 = arith.constant 0xFF800000 : f32
    %44 = vector.shape_cast %8 : vector<1x8x8xi1> to vector<1x8x8xi1>
    %45 = vector.broadcast %44 : vector<1x8x8xi1> to vector<2x8x8xi1>
    %46 = vector.broadcast %cst_13 : f32 to vector<2x8x8xf32>
    %47 = arith.select %45, %43, %46 : vector<2x8x8xi1>, vector<2x8x8xf32>
    %cst_14 = arith.constant dense<0xFF800000> : vector<2x8xf32>
    %48 = vector.multi_reduction <maximumf>, %47, %cst_14 [2] : vector<2x8x8xf32> to vector<2x8xf32>
    %cst_15 = arith.constant 0xFF800000 : f32
    %49 = vector.broadcast %cst_15 : f32 to vector<2x8xf32>
    %50 = arith.maximumf %49, %48 : vector<2x8xf32>
    %51 = vector.shape_cast %50 : vector<2x8xf32> to vector<2x8x1xf32>
    %52 = vector.broadcast %51 : vector<2x8x1xf32> to vector<2x8x8xf32>
    %53 = arith.subf %47, %52 : vector<2x8x8xf32>
    %54 = math.exp %53 : vector<2x8x8xf32>
    %cst_16 = arith.constant dense<0.000000e+00> : vector<2x8xf32>
    %55 = vector.multi_reduction <add>, %54, %cst_16 [2] : vector<2x8x8xf32> to vector<2x8xf32>
    %56 = vector.shape_cast %55 : vector<2x8xf32> to vector<2x8x1xf32>
    %57 = vector.broadcast %56 : vector<2x8x1xf32> to vector<2x8x8xf32>
    %58 = arith.divf %54, %57 : vector<2x8x8xf32>
    %59 = arith.truncf %58 : vector<2x8x8xf32> to vector<2x8x8xbf16>
    "tpu.trace_start"() <{level = 10 : i32, message = "bqk,bkd->bqd"}> : () -> ()
    %cst_17 = arith.constant dense<0.000000e+00> : vector<2x8x8xf32>
    %60 = tpu.matmul %59, %40, %cst_17 {dimension_numbers = #tpu.dot_dimension_numbers<[2], [1], [1], [2], [0, 0, 0, 1, 1, 2], [0], [0]>} : vector<2x8x8xbf16>, vector<2x8x8xbf16>, vector<2x8x8xf32> -> vector<2x8x8xf32>
    "tpu.trace_stop"() : () -> ()
    %61 = vector.extract_strided_slice %4 {offsets = [0, 0, 16], sizes = [2, 8, 8], strides = [1, 1, 1]} : vector<2x8x96xf32> to vector<2x8x8xf32>
    %62 = arith.truncf %61 : vector<2x8x8xf32> to vector<2x8x8xbf16>
    %63 = vector.extract_strided_slice %4 {offsets = [0, 0, 48], sizes = [2, 8, 8], strides = [1, 1, 1]} : vector<2x8x96xf32> to vector<2x8x8xf32>
    %64 = arith.truncf %63 : vector<2x8x8xf32> to vector<2x8x8xbf16>
    %65 = vector.extract_strided_slice %4 {offsets = [0, 0, 80], sizes = [2, 8, 8], strides = [1, 1, 1]} : vector<2x8x96xf32> to vector<2x8x8xf32>
    %66 = arith.truncf %65 : vector<2x8x8xf32> to vector<2x8x8xbf16>
    "tpu.trace_start"() <{level = 10 : i32, message = "bqd,bkd->bqk"}> : () -> ()
    %cst_18 = arith.constant dense<0.000000e+00> : vector<2x8x8xf32>
    %67 = tpu.matmul %62, %64, %cst_18 {dimension_numbers = #tpu.dot_dimension_numbers<[2], [2], [1], [1], [0, 0, 0, 1, 1, 1], [0], [0]>} : vector<2x8x8xbf16>, vector<2x8x8xbf16>, vector<2x8x8xf32> -> vector<2x8x8xf32>
    "tpu.trace_stop"() : () -> ()
    %cst_19 = arith.constant 0.176776692 : f32
    %68 = vector.broadcast %cst_19 : f32 to vector<2x8x8xf32>
    %69 = arith.mulf %67, %68 : vector<2x8x8xf32>
    %cst_20 = arith.constant 0xFF800000 : f32
    %70 = vector.shape_cast %8 : vector<1x8x8xi1> to vector<1x8x8xi1>
    %71 = vector.broadcast %70 : vector<1x8x8xi1> to vector<2x8x8xi1>
    %72 = vector.broadcast %cst_20 : f32 to vector<2x8x8xf32>
    %73 = arith.select %71, %69, %72 : vector<2x8x8xi1>, vector<2x8x8xf32>
    %cst_21 = arith.constant dense<0xFF800000> : vector<2x8xf32>
    %74 = vector.multi_reduction <maximumf>, %73, %cst_21 [2] : vector<2x8x8xf32> to vector<2x8xf32>
    %cst_22 = arith.constant 0xFF800000 : f32
    %75 = vector.broadcast %cst_22 : f32 to vector<2x8xf32>
    %76 = arith.maximumf %75, %74 : vector<2x8xf32>
    %77 = vector.shape_cast %76 : vector<2x8xf32> to vector<2x8x1xf32>
    %78 = vector.broadcast %77 : vector<2x8x1xf32> to vector<2x8x8xf32>
    %79 = arith.subf %73, %78 : vector<2x8x8xf32>
    %80 = math.exp %79 : vector<2x8x8xf32>
    %cst_23 = arith.constant dense<0.000000e+00> : vector<2x8xf32>
    %81 = vector.multi_reduction <add>, %80, %cst_23 [2] : vector<2x8x8xf32> to vector<2x8xf32>
    %82 = vector.shape_cast %81 : vector<2x8xf32> to vector<2x8x1xf32>
    %83 = vector.broadcast %82 : vector<2x8x1xf32> to vector<2x8x8xf32>
    %84 = arith.divf %80, %83 : vector<2x8x8xf32>
    %85 = arith.truncf %84 : vector<2x8x8xf32> to vector<2x8x8xbf16>
    "tpu.trace_start"() <{level = 10 : i32, message = "bqk,bkd->bqd"}> : () -> ()
    %cst_24 = arith.constant dense<0.000000e+00> : vector<2x8x8xf32>
    %86 = tpu.matmul %85, %66, %cst_24 {dimension_numbers = #tpu.dot_dimension_numbers<[2], [1], [1], [2], [0, 0, 0, 1, 1, 2], [0], [0]>} : vector<2x8x8xbf16>, vector<2x8x8xbf16>, vector<2x8x8xf32> -> vector<2x8x8xf32>
    "tpu.trace_stop"() : () -> ()
    %87 = vector.extract_strided_slice %4 {offsets = [0, 0, 24], sizes = [2, 8, 8], strides = [1, 1, 1]} : vector<2x8x96xf32> to vector<2x8x8xf32>
    %88 = arith.truncf %87 : vector<2x8x8xf32> to vector<2x8x8xbf16>
    %89 = vector.extract_strided_slice %4 {offsets = [0, 0, 56], sizes = [2, 8, 8], strides = [1, 1, 1]} : vector<2x8x96xf32> to vector<2x8x8xf32>
    %90 = arith.truncf %89 : vector<2x8x8xf32> to vector<2x8x8xbf16>
    %91 = vector.extract_strided_slice %4 {offsets = [0, 0, 88], sizes = [2, 8, 8], strides = [1, 1, 1]} : vector<2x8x96xf32> to vector<2x8x8xf32>
    %92 = arith.truncf %91 : vector<2x8x8xf32> to vector<2x8x8xbf16>
    "tpu.trace_start"() <{level = 10 : i32, message = "bqd,bkd->bqk"}> : () -> ()
    %cst_25 = arith.constant dense<0.000000e+00> : vector<2x8x8xf32>
    %93 = tpu.matmul %88, %90, %cst_25 {dimension_numbers = #tpu.dot_dimension_numbers<[2], [2], [1], [1], [0, 0, 0, 1, 1, 1], [0], [0]>} : vector<2x8x8xbf16>, vector<2x8x8xbf16>, vector<2x8x8xf32> -> vector<2x8x8xf32>
    "tpu.trace_stop"() : () -> ()
    %cst_26 = arith.constant 0.176776692 : f32
    %94 = vector.broadcast %cst_26 : f32 to vector<2x8x8xf32>
    %95 = arith.mulf %93, %94 : vector<2x8x8xf32>
    %cst_27 = arith.constant 0xFF800000 : f32
    %96 = vector.shape_cast %8 : vector<1x8x8xi1> to vector<1x8x8xi1>
    %97 = vector.broadcast %96 : vector<1x8x8xi1> to vector<2x8x8xi1>
    %98 = vector.broadcast %cst_27 : f32 to vector<2x8x8xf32>
    %99 = arith.select %97, %95, %98 : vector<2x8x8xi1>, vector<2x8x8xf32>
    %cst_28 = arith.constant dense<0xFF800000> : vector<2x8xf32>
    %100 = vector.multi_reduction <maximumf>, %99, %cst_28 [2] : vector<2x8x8xf32> to vector<2x8xf32>
    %cst_29 = arith.constant 0xFF800000 : f32
    %101 = vector.broadcast %cst_29 : f32 to vector<2x8xf32>
    %102 = arith.maximumf %101, %100 : vector<2x8xf32>
    %103 = vector.shape_cast %102 : vector<2x8xf32> to vector<2x8x1xf32>
    %104 = vector.broadcast %103 : vector<2x8x1xf32> to vector<2x8x8xf32>
    %105 = arith.subf %99, %104 : vector<2x8x8xf32>
    %106 = math.exp %105 : vector<2x8x8xf32>
    %cst_30 = arith.constant dense<0.000000e+00> : vector<2x8xf32>
    %107 = vector.multi_reduction <add>, %106, %cst_30 [2] : vector<2x8x8xf32> to vector<2x8xf32>
    %108 = vector.shape_cast %107 : vector<2x8xf32> to vector<2x8x1xf32>
    %109 = vector.broadcast %108 : vector<2x8x1xf32> to vector<2x8x8xf32>
    %110 = arith.divf %106, %109 : vector<2x8x8xf32>
    %111 = arith.truncf %110 : vector<2x8x8xf32> to vector<2x8x8xbf16>
    "tpu.trace_start"() <{level = 10 : i32, message = "bqk,bkd->bqd"}> : () -> ()
    %cst_31 = arith.constant dense<0.000000e+00> : vector<2x8x8xf32>
    %112 = tpu.matmul %111, %92, %cst_31 {dimension_numbers = #tpu.dot_dimension_numbers<[2], [1], [1], [2], [0, 0, 0, 1, 1, 2], [0], [0]>} : vector<2x8x8xbf16>, vector<2x8x8xbf16>, vector<2x8x8xf32> -> vector<2x8x8xf32>
    "tpu.trace_stop"() : () -> ()
    %113 = tpu.concatenate %34, %60, %86, %112 in 2 : vector<2x8x8xf32>, vector<2x8x8xf32>, vector<2x8x8xf32>, vector<2x8x8xf32> -> vector<2x8x32xf32>
    %114 = vector.shape_cast %113 : vector<2x8x32xf32> to vector<16x32xf32>
    %115 = arith.truncf %114 : vector<16x32xf32> to vector<16x32xbf16>
    %c0_32 = arith.constant 0 : index
    %c0_33 = arith.constant 0 : index
    %116 = vector.load %arg3[%c0_32, %c0_33] : memref<32x128xbf16, #tpu.memory_space<vmem>>, vector<32x128xbf16>
    %cst_34 = arith.constant dense<0.000000e+00> : vector<16x128xf32>
    %117 = tpu.matmul %115, %116, %cst_34 {dimension_numbers = #tpu.dot_dimension_numbers<[1], [0], [0], [1], [0, 0, 1, 1], [], []>} : vector<16x32xbf16>, vector<32x128xbf16>, vector<16x128xf32> -> vector<16x128xf32>
    %c0_35 = arith.constant 0 : index
    %c0_36 = arith.constant 0 : index
    %118 = vector.load %arg4[%c0_35, %c0_36] : memref<1x128xf32, #tpu.memory_space<vmem>>, vector<1x128xf32>
    %119 = vector.broadcast %118 : vector<1x128xf32> to vector<16x128xf32>
    %120 = arith.addf %117, %119 : vector<16x128xf32>
    %121 = vector.shape_cast %120 : vector<16x128xf32> to vector<2x8x128xf32>
    %c0_37 = arith.constant 0 : index
    %c0_38 = arith.constant 0 : index
    %c0_39 = arith.constant 0 : index
    %122 = vector.load %arg5[%c0_37, %c0_38, %c0_39] : memref<2x8x128xf32, #tpu.memory_space<vmem>>, vector<2x8x128xf32>
    tpu.vector_store %arg5[%c0_37, %c0_38, %c0_39], %121 {strides = array<i32>} : memref<2x8x128xf32, #tpu.memory_space<vmem>>, vector<2x8x128xf32>,
    return
  }
  func.func @transform_0(%arg0: i32) -> (i32, i32, i32) {
    %c0_i32 = arith.constant 0 : i32
    %c0_i32_0 = arith.constant 0 : i32
    %c0_i32_1 = arith.constant 0 : i32
    return %arg0, %c0_i32, %c0_i32_0 : i32, i32, i32
  }
  func.func @transform_1(%arg0: i32) -> (i32, i32) {
    %c0_i32 = arith.constant 0 : i32
    %c0_i32_0 = arith.constant 0 : i32
    %c0_i32_1 = arith.constant 0 : i32
    return %c0_i32, %c0_i32_0 : i32, i32
  }
  func.func @transform_2(%arg0: i32) -> (i32, i32) {
    %c0_i32 = arith.constant 0 : i32
    %c0_i32_0 = arith.constant 0 : i32
    %c0_i32_1 = arith.constant 0 : i32
    return %c0_i32, %c0_i32_0 : i32, i32
  }
  func.func @transform_3(%arg0: i32) -> (i32, i32) {
    %c0_i32 = arith.constant 0 : i32
    %c0_i32_0 = arith.constant 0 : i32
    %c0_i32_1 = arith.constant 0 : i32
    return %c0_i32, %c0_i32_0 : i32, i32
  }
  func.func @transform_4(%arg0: i32) -> (i32, i32, i32) {
    %c0_i32 = arith.constant 0 : i32
    %c0_i32_0 = arith.constant 0 : i32
    %c0_i32_1 = arith.constant 0 : i32
    return %arg0, %c0_i32, %c0_i32_0 : i32, i32, i32
  }
}

</mosaic_0001>

<llo_original>
// kernel: tpu_custom_call.1
$region0: #{tpu_custom_call.1}
  #allocation0 [shape = 'u32[]', space=smem, size = 0x4, offset = 0x4, fixed_abs, tag = 'smem constant byte address 0x4 - core index']
  #allocation1 [shape = 'u32[72,128]{1,0:T(1,128)}', space=vmem, size = 0x9000, scoped, tag = 'internal scratch']
  %s0 = inlined_call_operand.hbm [shape: bf16[2,8,32], index: 0, kind: input, shape index: {}]
  %s1 = inlined_call_operand.hbm [shape: bf16[32,96], index: 1, kind: input, shape index: {}]
  %s2 = inlined_call_operand.hbm [shape: bf16[32,128], index: 2, kind: input, shape index: {}]
  %s3 = inlined_call_operand.vmem [shape: f32[1,128], index: 3, kind: input, shape index: {}]
  %s4 = inlined_call_operand.hbm [shape: f32[2,8,128], index: 4, kind: output, shape index: {}]
  %s5 = sld [smem:[#allocation0]]
  $region38: #{tpu_custom_call.1} parent=0
    _
  %s7 = ssub.s32 1, %s5
  %s8 = scalar_select 0, %s7, %s5
  $region1: #{tpu_custom_call.1} parent=0
    #allocation2 [shape = 'u8[4096]{0}', space=vmem, size = 0x1000, scoped, tag = 'input window, operand 0, single buffered']
    #allocation3 [shape = 's32[1]{0}', space=sflag, size = 0x4, scoped, tag = 'scoped memory for tpu_custom_call.1']
    #allocation4 [shape = 's32[1]{0}', space=sflag, size = 0x4, scoped, tag = 'scoped memory for tpu_custom_call.1']
    #allocation5 [shape = 'u8[8192]{0}', space=vmem, size = 0x2000, scoped, tag = 'input window, operand 1, single buffered']
    #allocation6 [shape = 's32[1]{0}', space=sflag, size = 0x4, scoped, tag = 'scoped memory for tpu_custom_call.1']
    #allocation7 [shape = 'u8[8192]{0}', space=vmem, size = 0x2000, scoped, tag = 'input window, operand 2, single buffered']
    #allocation8 [shape = 'u8[8192]{0}', space=vmem, size = 0x2000, scoped, tag = 'output window, operand 0, single buffered']
    %9 = vsyncpa [#allocation3], 0
    %10 = vsyncpa [#allocation6], 0
    %11 = vsyncpa [#allocation4], 0
    // Predicated region
    $region2: #{tpu_custom_call.1} parent=1 // pred_check
      _
    $region3: #{tpu_custom_call.1} parent=1 // pred_check_branch
      %13 = sbr.rel (0) target = $region5
    $region4: #{tpu_custom_call.1} parent=1 // pred_region
      %15 = vsyncadd [#allocation3], 0
      %s16 = sshll.u32 %s0, 4
      %s17 = int_to_ptr.hbm [resolvable:$true] %s16
      %s18 = sshll.u32 [#allocation2], 4
      %s19 = int_to_ptr.vmem [resolvable:$true] %s18
      %24 = dma.hbm_to_vmem [thread:$0]  %s17, 128, %s19, [#allocation3], 64, 64, 4
    $region5: #{tpu_custom_call.1} parent=1 // pred_fallthru
      _
    // Predicated region
    $region6: #{tpu_custom_call.1} parent=1 // pred_check
      _
    $region7: #{tpu_custom_call.1} parent=1 // pred_check_branch
      %26 = sbr.rel (0) target = $region9
    $region8: #{tpu_custom_call.1} parent=1 // pred_region
      %28 = vsyncadd [#allocation6], 0
      %s29 = sshll.u32 %s1, 4
      %s30 = int_to_ptr.hbm [resolvable:$true] %s29
      %s31 = sshll.u32 [#allocation5], 4
      %s32 = int_to_ptr.vmem [resolvable:$true] %s31
      %37 = dma.hbm_to_vmem [thread:$0]  %s30, 256, %s32, [#allocation6], 64, 64, 4
    $region9: #{tpu_custom_call.1} parent=1 // pred_fallthru
      _
    // Predicated region
    $region10: #{tpu_custom_call.1} parent=1 // pred_check
      _
    $region11: #{tpu_custom_call.1} parent=1 // pred_check_branch
      %39 = sbr.rel (0) target = $region13
    $region12: #{tpu_custom_call.1} parent=1 // pred_region
      %41 = vsyncadd [#allocation6], 0
      %s42 = sshll.u32 %s2, 4
      %s43 = int_to_ptr.hbm [resolvable:$true] %s42
      %s44 = sshll.u32 [#allocation7], 4
      %s45 = int_to_ptr.vmem [resolvable:$true] %s44
      %50 = dma.hbm_to_vmem [thread:$0]  %s43, 256, %s45, [#allocation6], 64, 64, 4
    $region13: #{tpu_custom_call.1} parent=1 // pred_fallthru
      _
    // Predicated region
    $region14: #{tpu_custom_call.1} parent=1 // pred_check
      _
    $region15: #{tpu_custom_call.1} parent=1 // pred_check_branch
      %52 = sbr.rel (0) target = $region17
    $region16: #{tpu_custom_call.1} parent=1 // pred_region
      _
    $region17: #{tpu_custom_call.1} parent=1 // pred_fallthru
      _
    // Predicated region
    $region18: #{tpu_custom_call.1} parent=1 // pred_check
      _
    $region19: #{tpu_custom_call.1} parent=1 // pred_check_branch
      %54 = sbr.rel (0) target = $region21
    $region20: #{tpu_custom_call.1} parent=1 // pred_region
      %56 = dma.done [#allocation3], 128
    $region21: #{tpu_custom_call.1} parent=1 // pred_fallthru
      _
    // Predicated region
    $region22: #{tpu_custom_call.1} parent=1 // pred_check
      _
    $region23: #{tpu_custom_call.1} parent=1 // pred_check_branch
      %58 = sbr.rel (0) target = $region25
    $region24: #{tpu_custom_call.1} parent=1 // pred_region
      %60 = dma.done [#allocation6], 256
    $region25: #{tpu_custom_call.1} parent=1 // pred_fallthru
      _
    // Predicated region
    $region26: #{tpu_custom_call.1} parent=1 // pred_check
      _
    $region27: #{tpu_custom_call.1} parent=1 // pred_check_branch
      %62 = sbr.rel (0) target = $region29
    $region28: #{tpu_custom_call.1} parent=1 // pred_region
      %64 = dma.done [#allocation6], 256
    $region29: #{tpu_custom_call.1} parent=1 // pred_fallthru
      _
    %v66 = vld [vmem:[#allocation2] sm:$0xf]
    %v67 = vld [vmem:[#allocation2 + $0x4] sm:$0xf]
    %v68 = vld [vmem:[#allocation5] sm:$0xf]
    %v69 = vld [vmem:[#allocation5 + $0x4] sm:$0xf]
    %v70 = vld [vmem:[#allocation5 + $0x8] sm:$0xf]
    %v71 = vld [vmem:[#allocation5 + $0xc] sm:$0xf]
    %v74 = vunpack.c.l.b16 %v66
    %v75 = vunpack.c.l.b16 %v67
    %v76 = vpack.c.b16 %v75, %v74
    %v81 = vunpack.c.l.b16 %v68
    %v82 = vunpack.c.l.b16 %v69
    %v83 = vunpack.c.l.b16 %v70
    %v84 = vunpack.c.l.b16 %v71
    %v85 = vpack.c.b16 %v82, %v81
    %v86 = vpack.c.b16 %v84, %v83
    %vm89 = vcmask 261120
    %v91 = vsel %vm89, %v76, 0
    %93 = vmatpush.bf16.msra.mxu0 0
    %94 = vmatpush.bf16.msra.mxu0 0
    %95 = vmatpush.bf16.msra.mxu0 0
    %96 = vmatpush.bf16.msra.mxu0 0
    %97 = vmatpush.bf16.msra.mxu0 0
    %98 = vmatpush.bf16.msra.mxu0 0
    %99 = vmatpush.bf16.msra.mxu0 %v86
    %100 = vmatpush.bf16.msra.mxu0 %v85
    %101 = vmatmul.bf16.gmra.mxu0 %v91
    %v102 = vpop.f32.mrf.mxu0
    %v103 = vadd.f32 0.0, %v102
    %v104 = vpop.f32.mrf.mxu0
    %v105 = vadd.f32 0.0, %v104
    %106 = vdwg.mxu0
    %v107 = vlaneseq
    %v108 = vshrl.u32 %v107, 7
    %v109 = vlaneseq
    %v110 = vand.u32 %v109, 127
    %vm111 = vcmp.le.s32.totalorder %v110, %v108
    %v112 = vpack.c.bf16 %v103, %v103
    %v113 = vpack.c.bf16 %v105, %v105
    %v115 = vunpack.c.l.b16 %v112
    %v116 = vpack.c.b16 %v115, %v115
    %117 = vrot.lane.b32.xlu0 %v116, 96
    %v118 = vpop.permute.xlu0 %117
    %vm119 = vcmask 64512
    %v121 = vsel %vm119, %v112, 0
    %v124 = vsel %vm119, %v118, 0
    %126 = vmatpush.bf16.xpose.msra.mxu0 0
    %127 = vmatpush.bf16.xpose.msra.mxu0 0
    %128 = vmatpush.bf16.xpose.msra.mxu0 0
    %129 = vmatpush.bf16.xpose.msra.mxu0 0
    %130 = vmatpush.bf16.xpose.msra.mxu0 0
    %131 = vmatpush.bf16.xpose.msra.mxu0 0
    %132 = vmatpush.bf16.xpose.msra.mxu0 0
    %133 = vmatpush.bf16.xpose.msra.mxu0 %v124
    %134 = vmatmul.bf16.gmra.mxu0 %v121
    %v135 = vpop.f32.mrf.mxu0
    %v136 = vadd.f32 0.0, %v135
    %v137 = vpop.f32.mrf.mxu0
    %138 = vdwg.mxu0
    %v140 = vunpack.c.l.b16 %v113
    %v141 = vpack.c.b16 %v140, %v140
    %142 = vrot.lane.b32.xlu0 %v141, 96
    %v143 = vpop.permute.xlu0 %142
    %v145 = vsel %vm119, %v113, 0
    %v148 = vsel %vm119, %v143, 0
    %150 = vmatpush.bf16.xpose.msra.mxu0 0
    %151 = vmatpush.bf16.xpose.msra.mxu0 0
    %152 = vmatpush.bf16.xpose.msra.mxu0 0
    %153 = vmatpush.bf16.xpose.msra.mxu0 0
    %154 = vmatpush.bf16.xpose.msra.mxu0 0
    %155 = vmatpush.bf16.xpose.msra.mxu0 0
    %156 = vmatpush.bf16.xpose.msra.mxu0 0
    %157 = vmatpush.bf16.xpose.msra.mxu0 %v148
    %158 = vmatmul.bf16.gmra.mxu0 %v145
    %v159 = vpop.f32.mrf.mxu0
    %v160 = vadd.f32 0.0, %v159
    %v161 = vpop.f32.mrf.mxu0
    %162 = vdwg.mxu0
    %v163 = vmul.f32 %v136, 0.17677669
    %v164 = vmul.f32 %v160, 0.17677669
    %v165 = vsel %vm111, 1, 0
    %vm166 = vcmp.eq.s32.totalorder %v165, 1
    %v167 = vsel %vm166, %v163, -inf
    %v168 = vsel %vm166, %v164, -inf
    %v169 = vsel %vm119, %v167, -inf
    %170 = vmax.xlane.f32.xlu0 %v169
    %v171 = vpop.xlane.xlu0 %170
    %v172 = vsel %vm119, %v168, -inf
    %173 = vmax.xlane.f32.xlu0 %v172
    %v174 = vpop.xlane.xlu0 %173
    %v175 = vsub.f32 %v167, %v171
    %v176 = vsub.f32 %v168, %v174
    %v177 = vmul.f32 %v175, 1.442695
    %v178 = vpow.pop %v177
    %v179 = vmul.f32 %v176, 1.442695
    %v180 = vpow.pop %v179
    %v181 = vsel %vm119, %v178, 0.0
    %182 = vadd.xlane.f32.xlu0 %v181
    %v183 = vpop.xlane.xlu0 %182
    %v184 = vsel %vm119, %v180, 0.0
    %185 = vadd.xlane.f32.xlu0 %v184
    %v186 = vpop.xlane.xlu0 %185
    %v187 = vrcp.pop %v183
    %v188 = vmul.f32 %v183, %v187
    %v189 = vsub.f32 1.0, %v188
    %v190 = vmul.f32 %v187, %v189
    %v191 = vadd.f32 %v187, %v190
    %vm192 = vweird.f32 %v183
    %vm193 = vweird.f32 %v187
    %vm194 = vmor %vm192, %vm193
    %v195 = vsel %vm194, %v187, %v191
    %v196 = vand.u32 2147483647, %v183
    %vm197 = vcmp.eq.f32.partialorder %v196, 8.507059e+37
    %v198 = vand.u32 %v183, 2147483648
    %v199 = vor.u32 1.1754944e-38, %v198
    %v200 = vsel %vm197, %v199, %v195
    %v201 = vmul.f32 %v178, %v200
    %v202 = vrcp.pop %v186
    %v203 = vmul.f32 %v186, %v202
    %v204 = vsub.f32 1.0, %v203
    %v205 = vmul.f32 %v202, %v204
    %v206 = vadd.f32 %v202, %v205
    %vm207 = vweird.f32 %v186
    %vm208 = vweird.f32 %v202
    %vm209 = vmor %vm207, %vm208
    %v210 = vsel %vm209, %v202, %v206
    %v211 = vand.u32 2147483647, %v186
    %vm212 = vcmp.eq.f32.partialorder %v211, 8.507059e+37
    %v213 = vand.u32 %v186, 2147483648
    %v214 = vor.u32 1.1754944e-38, %v213
    %v215 = vsel %vm212, %v214, %v210
    %v216 = vmul.f32 %v180, %v215
    %v217 = vpack.c.bf16 %v201, %v201
    %v218 = vpack.c.bf16 %v216, %v216
    %219 = vrot.lane.b32.xlu0 %v116, 64
    %v220 = vpop.permute.xlu0 %219
    %v222 = vsel %vm119, %v217, 0
    %vm224 = vcmask 1043456
    %v226 = vsel %vm224, %v220, 0
    %228 = vmatpush.bf16.msra.mxu0 0
    %229 = vmatpush.bf16.msra.mxu0 0
    %230 = vmatpush.bf16.msra.mxu0 0
    %231 = vmatpush.bf16.msra.mxu0 0
    %232 = vmatpush.bf16.msra.mxu0 0
    %233 = vmatpush.bf16.msra.mxu0 0
    %234 = vmatpush.bf16.msra.mxu0 0
    %235 = vmatpush.bf16.msra.mxu0 %v226
    %236 = vmatmul.bf16.gmra.mxu0 %v222
    %v237 = vpop.f32.mrf.mxu0
    %v238 = vadd.f32 0.0, %v237
    %v239 = vpop.f32.mrf.mxu0
    %240 = vdwg.mxu0
    %241 = vrot.lane.b32.xlu0 %v141, 64
    %v242 = vpop.permute.xlu0 %241
    %v244 = vsel %vm119, %v218, 0
    %v247 = vsel %vm224, %v242, 0
    %249 = vmatpush.bf16.msra.mxu0 0
    %250 = vmatpush.bf16.msra.mxu0 0
    %251 = vmatpush.bf16.msra.mxu0 0
    %252 = vmatpush.bf16.msra.mxu0 0
    %253 = vmatpush.bf16.msra.mxu0 0
    %254 = vmatpush.bf16.msra.mxu0 0
    %255 = vmatpush.bf16.msra.mxu0 0
    %256 = vmatpush.bf16.msra.mxu0 %v247
    %257 = vmatmul.bf16.gmra.mxu0 %v244
    %v258 = vpop.f32.mrf.mxu0
    %v259 = vadd.f32 0.0, %v258
    %v260 = vpop.f32.mrf.mxu0
    %261 = vdwg.mxu0
    %262 = vrot.lane.b32.xlu0 %v116, 120
    %v263 = vpop.permute.xlu0 %262
    %264 = vrot.lane.b32.xlu0 %v116, 88
    %v265 = vpop.permute.xlu0 %264
    %v267 = vsel %vm119, %v263, 0
    %v270 = vsel %vm119, %v265, 0
    %272 = vmatpush.bf16.xpose.msra.mxu0 0
    %273 = vmatpush.bf16.xpose.msra.mxu0 0
    %274 = vmatpush.bf16.xpose.msra.mxu0 0
    %275 = vmatpush.bf16.xpose.msra.mxu0 0
    %276 = vmatpush.bf16.xpose.msra.mxu0 0
    %277 = vmatpush.bf16.xpose.msra.mxu0 0
    %278 = vmatpush.bf16.xpose.msra.mxu0 0
    %279 = vmatpush.bf16.xpose.msra.mxu0 %v270
    %280 = vmatmul.bf16.gmra.mxu0 %v267
    %v281 = vpop.f32.mrf.mxu0
    %v282 = vadd.f32 0.0, %v281
    %v283 = vpop.f32.mrf.mxu0
    %284 = vdwg.mxu0
    %285 = vrot.lane.b32.xlu0 %v141, 120
    %v286 = vpop.permute.xlu0 %285
    %287 = vrot.lane.b32.xlu0 %v141, 88
    %v288 = vpop.permute.xlu0 %287
    %v290 = vsel %vm119, %v286, 0
    %v293 = vsel %vm119, %v288, 0
    %295 = vmatpush.bf16.xpose.msra.mxu0 0
    %296 = vmatpush.bf16.xpose.msra.mxu0 0
    %297 = vmatpush.bf16.xpose.msra.mxu0 0
    %298 = vmatpush.bf16.xpose.msra.mxu0 0
    %299 = vmatpush.bf16.xpose.msra.mxu0 0
    %300 = vmatpush.bf16.xpose.msra.mxu0 0
    %301 = vmatpush.bf16.xpose.msra.mxu0 0
    %302 = vmatpush.bf16.xpose.msra.mxu0 %v293
    %303 = vmatmul.bf16.gmra.mxu0 %v290
    %v304 = vpop.f32.mrf.mxu0
    %v305 = vadd.f32 0.0, %v304
    %v306 = vpop.f32.mrf.mxu0
    %307 = vdwg.mxu0
    %v308 = vmul.f32 %v282, 0.17677669
    %v309 = vmul.f32 %v305, 0.17677669
    %v310 = vsel %vm166, %v308, -inf
    %v311 = vsel %vm166, %v309, -inf
    %v312 = vsel %vm119, %v310, -inf
    %313 = vmax.xlane.f32.xlu0 %v312
    %v314 = vpop.xlane.xlu0 %313
    %v315 = vsel %vm119, %v311, -inf
    %316 = vmax.xlane.f32.xlu0 %v315
    %v317 = vpop.xlane.xlu0 %316
    %v318 = vsub.f32 %v310, %v314
    %v319 = vsub.f32 %v311, %v317
    %v320 = vmul.f32 %v318, 1.442695
    %v321 = vpow.pop %v320
    %v322 = vmul.f32 %v319, 1.442695
    %v323 = vpow.pop %v322
    %v324 = vsel %vm119, %v321, 0.0
    %325 = vadd.xlane.f32.xlu0 %v324
    %v326 = vpop.xlane.xlu0 %325
    %v327 = vsel %vm119, %v323, 0.0
    %328 = vadd.xlane.f32.xlu0 %v327
    %v329 = vpop.xlane.xlu0 %328
    %v330 = vrcp.pop %v326
    %v331 = vmul.f32 %v326, %v330
    %v332 = vsub.f32 1.0, %v331
    %v333 = vmul.f32 %v330, %v332
    %v334 = vadd.f32 %v330, %v333
    %vm335 = vweird.f32 %v326
    %vm336 = vweird.f32 %v330
    %vm337 = vmor %vm335, %vm336
    %v338 = vsel %vm337, %v330, %v334
    %v339 = vand.u32 2147483647, %v326
    %vm340 = vcmp.eq.f32.partialorder %v339, 8.507059e+37
    %v341 = vand.u32 %v326, 2147483648
    %v342 = vor.u32 1.1754944e-38, %v341
    %v343 = vsel %vm340, %v342, %v338
    %v344 = vmul.f32 %v321, %v343
    %v345 = vrcp.pop %v329
    %v346 = vmul.f32 %v329, %v345
    %v347 = vsub.f32 1.0, %v346
    %v348 = vmul.f32 %v345, %v347
    %v349 = vadd.f32 %v345, %v348
    %vm350 = vweird.f32 %v329
    %vm351 = vweird.f32 %v345
    %vm352 = vmor %vm350, %vm351
    %v353 = vsel %vm352, %v345, %v349
    %v354 = vand.u32 2147483647, %v329
    %vm355 = vcmp.eq.f32.partialorder %v354, 8.507059e+37
    %v356 = vand.u32 %v329, 2147483648
    %v357 = vor.u32 1.1754944e-38, %v356
    %v358 = vsel %vm355, %v357, %v353
    %v359 = vmul.f32 %v323, %v358
    %v360 = vpack.c.bf16 %v344, %v344
    %v361 = vpack.c.bf16 %v359, %v359
    %362 = vrot.lane.b32.xlu0 %v116, 56
    %v363 = vpop.permute.xlu0 %362
    %v365 = vsel %vm119, %v360, 0
    %v368 = vsel %vm224, %v363, 0
    %370 = vmatpush.bf16.msra.mxu0 0
    %371 = vmatpush.bf16.msra.mxu0 0
    %372 = vmatpush.bf16.msra.mxu0 0
    %373 = vmatpush.bf16.msra.mxu0 0
    %374 = vmatpush.bf16.msra.mxu0 0
    %375 = vmatpush.bf16.msra.mxu0 0
    %376 = vmatpush.bf16.msra.mxu0 0
    %377 = vmatpush.bf16.msra.mxu0 %v368
    %378 = vmatmul.bf16.gmra.mxu0 %v365
    %v379 = vpop.f32.mrf.mxu0
    %v380 = vadd.f32 0.0, %v379
    %v381 = vpop.f32.mrf.mxu0
    %382 = vdwg.mxu0
    %383 = vrot.lane.b32.xlu0 %v141, 56
    %v384 = vpop.permute.xlu0 %383
    %v386 = vsel %vm119, %v361, 0
    %v389 = vsel %vm224, %v384, 0
    %391 = vmatpush.bf16.msra.mxu0 0
    %392 = vmatpush.bf16.msra.mxu0 0
    %393 = vmatpush.bf16.msra.mxu0 0
    %394 = vmatpush.bf16.msra.mxu0 0
    %395 = vmatpush.bf16.msra.mxu0 0
    %396 = vmatpush.bf16.msra.mxu0 0
    %397 = vmatpush.bf16.msra.mxu0 0
    %398 = vmatpush.bf16.msra.mxu0 %v389
    %399 = vmatmul.bf16.gmra.mxu0 %v386
    %v400 = vpop.f32.mrf.mxu0
    %v401 = vadd.f32 0.0, %v400
    %v402 = vpop.f32.mrf.mxu0
    %403 = vdwg.mxu0
    %404 = vrot.lane.b32.xlu0 %v116, 112
    %v405 = vpop.permute.xlu0 %404
    %406 = vrot.lane.b32.xlu0 %v116, 80
    %v407 = vpop.permute.xlu0 %406
    %v409 = vsel %vm119, %v405, 0
    %v412 = vsel %vm119, %v407, 0
    %414 = vmatpush.bf16.xpose.msra.mxu0 0
    %415 = vmatpush.bf16.xpose.msra.mxu0 0
    %416 = vmatpush.bf16.xpose.msra.mxu0 0
    %417 = vmatpush.bf16.xpose.msra.mxu0 0
    %418 = vmatpush.bf16.xpose.msra.mxu0 0
    %419 = vmatpush.bf16.xpose.msra.mxu0 0
    %420 = vmatpush.bf16.xpose.msra.mxu0 0
    %421 = vmatpush.bf16.xpose.msra.mxu0 %v412
    %422 = vmatmul.bf16.gmra.mxu0 %v409
    %v423 = vpop.f32.mrf.mxu0
    %v424 = vadd.f32 0.0, %v423
    %v425 = vpop.f32.mrf.mxu0
    %426 = vdwg.mxu0
    %427 = vrot.lane.b32.xlu0 %v141, 112
    %v428 = vpop.permute.xlu0 %427
    %429 = vrot.lane.b32.xlu0 %v141, 80
    %v430 = vpop.permute.xlu0 %429
    %v432 = vsel %vm119, %v428, 0
    %v435 = vsel %vm119, %v430, 0
    %437 = vmatpush.bf16.xpose.msra.mxu0 0
    %438 = vmatpush.bf16.xpose.msra.mxu0 0
    %439 = vmatpush.bf16.xpose.msra.mxu0 0
    %440 = vmatpush.bf16.xpose.msra.mxu0 0
    %441 = vmatpush.bf16.xpose.msra.mxu0 0
    %442 = vmatpush.bf16.xpose.msra.mxu0 0
    %443 = vmatpush.bf16.xpose.msra.mxu0 0
    %444 = vmatpush.bf16.xpose.msra.mxu0 %v435
    %445 = vmatmul.bf16.gmra.mxu0 %v432
    %v446 = vpop.f32.mrf.mxu0
    %v447 = vadd.f32 0.0, %v446
    %v448 = vpop.f32.mrf.mxu0
    %449 = vdwg.mxu0
    %v450 = vmul.f32 %v424, 0.17677669
    %v451 = vmul.f32 %v447, 0.17677669
    %v452 = vsel %vm166, %v450, -inf
    %v453 = vsel %vm166, %v451, -inf
    %v454 = vsel %vm119, %v452, -inf
    %455 = vmax.xlane.f32.xlu0 %v454
    %v456 = vpop.xlane.xlu0 %455
    %v457 = vsel %vm119, %v453, -inf
    %458 = vmax.xlane.f32.xlu0 %v457
    %v459 = vpop.xlane.xlu0 %458
    %v460 = vsub.f32 %v452, %v456
    %v461 = vsub.f32 %v453, %v459
    %v462 = vmul.f32 %v460, 1.442695
    %v463 = vpow.pop %v462
    %v464 = vmul.f32 %v461, 1.442695
    %v465 = vpow.pop %v464
    %v466 = vsel %vm119, %v463, 0.0
    %467 = vadd.xlane.f32.xlu0 %v466
    %v468 = vpop.xlane.xlu0 %467
    %v469 = vsel %vm119, %v465, 0.0
    %470 = vadd.xlane.f32.xlu0 %v469
    %v471 = vpop.xlane.xlu0 %470
    %v472 = vrcp.pop %v468
    %v473 = vmul.f32 %v468, %v472
    %v474 = vsub.f32 1.0, %v473
    %v475 = vmul.f32 %v472, %v474
    %v476 = vadd.f32 %v472, %v475
    %vm477 = vweird.f32 %v468
    %vm478 = vweird.f32 %v472
    %vm479 = vmor %vm477, %vm478
    %v480 = vsel %vm479, %v472, %v476
    %v481 = vand.u32 2147483647, %v468
    %vm482 = vcmp.eq.f32.partialorder %v481, 8.507059e+37
    %v483 = vand.u32 %v468, 2147483648
    %v484 = vor.u32 1.1754944e-38, %v483
    %v485 = vsel %vm482, %v484, %v480
    %v486 = vmul.f32 %v463, %v485
    %v487 = vrcp.pop %v471
    %v488 = vmul.f32 %v471, %v487
    %v489 = vsub.f32 1.0, %v488
    %v490 = vmul.f32 %v487, %v489
    %v491 = vadd.f32 %v487, %v490
    %vm492 = vweird.f32 %v471
    %vm493 = vweird.f32 %v487
    %vm494 = vmor %vm492, %vm493
    %v495 = vsel %vm494, %v487, %v491
    %v496 = vand.u32 2147483647, %v471
    %vm497 = vcmp.eq.f32.partialorder %v496, 8.507059e+37
    %v498 = vand.u32 %v471, 2147483648
    %v499 = vor.u32 1.1754944e-38, %v498
    %v500 = vsel %vm497, %v499, %v495
    %v501 = vmul.f32 %v465, %v500
    %v502 = vpack.c.bf16 %v486, %v486
    %v503 = vpack.c.bf16 %v501, %v501
    %504 = vrot.lane.b32.xlu0 %v116, 48
    %v505 = vpop.permute.xlu0 %504
    %v507 = vsel %vm119, %v502, 0
    %v510 = vsel %vm224, %v505, 0
    %512 = vmatpush.bf16.msra.mxu0 0
    %513 = vmatpush.bf16.msra.mxu0 0
    %514 = vmatpush.bf16.msra.mxu0 0
    %515 = vmatpush.bf16.msra.mxu0 0
    %516 = vmatpush.bf16.msra.mxu0 0
    %517 = vmatpush.bf16.msra.mxu0 0
    %518 = vmatpush.bf16.msra.mxu0 0
    %519 = vmatpush.bf16.msra.mxu0 %v510
    %520 = vmatmul.bf16.gmra.mxu0 %v507
    %v521 = vpop.f32.mrf.mxu0
    %v522 = vadd.f32 0.0, %v521
    %v523 = vpop.f32.mrf.mxu0
    %524 = vdwg.mxu0
    %525 = vrot.lane.b32.xlu0 %v141, 48
    %v526 = vpop.permute.xlu0 %525
    %v528 = vsel %vm119, %v503, 0
    %v531 = vsel %vm224, %v526, 0
    %533 = vmatpush.bf16.msra.mxu0 0
    %534 = vmatpush.bf16.msra.mxu0 0
    %535 = vmatpush.bf16.msra.mxu0 0
    %536 = vmatpush.bf16.msra.mxu0 0
    %537 = vmatpush.bf16.msra.mxu0 0
    %538 = vmatpush.bf16.msra.mxu0 0
    %539 = vmatpush.bf16.msra.mxu0 0
    %540 = vmatpush.bf16.msra.mxu0 %v531
    %541 = vmatmul.bf16.gmra.mxu0 %v528
    %v542 = vpop.f32.mrf.mxu0
    %v543 = vadd.f32 0.0, %v542
    %v544 = vpop.f32.mrf.mxu0
    %545 = vdwg.mxu0
    %546 = vrot.lane.b32.xlu0 %v116, 104
    %v547 = vpop.permute.xlu0 %546
    %548 = vrot.lane.b32.xlu0 %v116, 72
    %v549 = vpop.permute.xlu0 %548
    %v551 = vsel %vm119, %v547, 0
    %v554 = vsel %vm119, %v549, 0
    %556 = vmatpush.bf16.xpose.msra.mxu0 0
    %557 = vmatpush.bf16.xpose.msra.mxu0 0
    %558 = vmatpush.bf16.xpose.msra.mxu0 0
    %559 = vmatpush.bf16.xpose.msra.mxu0 0
    %560 = vmatpush.bf16.xpose.msra.mxu0 0
    %561 = vmatpush.bf16.xpose.msra.mxu0 0
    %562 = vmatpush.bf16.xpose.msra.mxu0 0
    %563 = vmatpush.bf16.xpose.msra.mxu0 %v554
    %564 = vmatmul.bf16.gmra.mxu0 %v551
    %v565 = vpop.f32.mrf.mxu0
    %v566 = vadd.f32 0.0, %v565
    %v567 = vpop.f32.mrf.mxu0
    %568 = vdwg.mxu0
    %569 = vrot.lane.b32.xlu0 %v141, 104
    %v570 = vpop.permute.xlu0 %569
    %571 = vrot.lane.b32.xlu0 %v141, 72
    %v572 = vpop.permute.xlu0 %571
    %v574 = vsel %vm119, %v570, 0
    %v577 = vsel %vm119, %v572, 0
    %579 = vmatpush.bf16.xpose.msra.mxu0 0
    %580 = vmatpush.bf16.xpose.msra.mxu0 0
    %581 = vmatpush.bf16.xpose.msra.mxu0 0
    %582 = vmatpush.bf16.xpose.msra.mxu0 0
    %583 = vmatpush.bf16.xpose.msra.mxu0 0
    %584 = vmatpush.bf16.xpose.msra.mxu0 0
    %585 = vmatpush.bf16.xpose.msra.mxu0 0
    %586 = vmatpush.bf16.xpose.msra.mxu0 %v577
    %587 = vmatmul.bf16.gmra.mxu0 %v574
    %v588 = vpop.f32.mrf.mxu0
    %v589 = vadd.f32 0.0, %v588
    %v590 = vpop.f32.mrf.mxu0
    %591 = vdwg.mxu0
    %v592 = vmul.f32 %v566, 0.17677669
    %v593 = vmul.f32 %v589, 0.17677669
    %v594 = vsel %vm166, %v592, -inf
    %v595 = vsel %vm166, %v593, -inf
    %v596 = vsel %vm119, %v594, -inf
    %597 = vmax.xlane.f32.xlu0 %v596
    %v598 = vpop.xlane.xlu0 %597
    %v599 = vsel %vm119, %v595, -inf
    %600 = vmax.xlane.f32.xlu0 %v599
    %v601 = vpop.xlane.xlu0 %600
    %v602 = vsub.f32 %v594, %v598
    %v603 = vsub.f32 %v595, %v601
    %v604 = vmul.f32 %v602, 1.442695
    %v605 = vpow.pop %v604
    %v606 = vmul.f32 %v603, 1.442695
    %v607 = vpow.pop %v606
    %v608 = vsel %vm119, %v605, 0.0
    %609 = vadd.xlane.f32.xlu0 %v608
    %v610 = vpop.xlane.xlu0 %609
    %v611 = vsel %vm119, %v607, 0.0
    %612 = vadd.xlane.f32.xlu0 %v611
    %v613 = vpop.xlane.xlu0 %612
    %v614 = vrcp.pop %v610
    %v615 = vmul.f32 %v610, %v614
    %v616 = vsub.f32 1.0, %v615
    %v617 = vmul.f32 %v614, %v616
    %v618 = vadd.f32 %v614, %v617
    %vm619 = vweird.f32 %v610
    %vm620 = vweird.f32 %v614
    %vm621 = vmor %vm619, %vm620
    %v622 = vsel %vm621, %v614, %v618
    %v623 = vand.u32 2147483647, %v610
    %vm624 = vcmp.eq.f32.partialorder %v623, 8.507059e+37
    %v625 = vand.u32 %v610, 2147483648
    %v626 = vor.u32 1.1754944e-38, %v625
    %v627 = vsel %vm624, %v626, %v622
    %v628 = vmul.f32 %v605, %v627
    %v629 = vrcp.pop %v613
    %v630 = vmul.f32 %v613, %v629
    %v631 = vsub.f32 1.0, %v630
    %v632 = vmul.f32 %v629, %v631
    %v633 = vadd.f32 %v629, %v632
    %vm634 = vweird.f32 %v613
    %vm635 = vweird.f32 %v629
    %vm636 = vmor %vm634, %vm635
    %v637 = vsel %vm636, %v629, %v633
    %v638 = vand.u32 2147483647, %v613
    %vm639 = vcmp.eq.f32.partialorder %v638, 8.507059e+37
    %v640 = vand.u32 %v613, 2147483648
    %v641 = vor.u32 1.1754944e-38, %v640
    %v642 = vsel %vm639, %v641, %v637
    %v643 = vmul.f32 %v607, %v642
    %v644 = vpack.c.bf16 %v628, %v628
    %v645 = vpack.c.bf16 %v643, %v643
    %646 = vrot.lane.b32.xlu0 %v116, 40
    %v647 = vpop.permute.xlu0 %646
    %v649 = vsel %vm119, %v644, 0
    %v652 = vsel %vm224, %v647, 0
    %654 = vmatpush.bf16.msra.mxu0 0
    %655 = vmatpush.bf16.msra.mxu0 0
    %656 = vmatpush.bf16.msra.mxu0 0
    %657 = vmatpush.bf16.msra.mxu0 0
    %658 = vmatpush.bf16.msra.mxu0 0
    %659 = vmatpush.bf16.msra.mxu0 0
    %660 = vmatpush.bf16.msra.mxu0 0
    %661 = vmatpush.bf16.msra.mxu0 %v652
    %662 = vmatmul.bf16.gmra.mxu0 %v649
    %v663 = vpop.f32.mrf.mxu0
    %v664 = vadd.f32 0.0, %v663
    %v665 = vpop.f32.mrf.mxu0
    %666 = vdwg.mxu0
    %667 = vrot.lane.b32.xlu0 %v141, 40
    %v668 = vpop.permute.xlu0 %667
    %v670 = vsel %vm119, %v645, 0
    %v673 = vsel %vm224, %v668, 0
    %675 = vmatpush.bf16.msra.mxu0 0
    %676 = vmatpush.bf16.msra.mxu0 0
    %677 = vmatpush.bf16.msra.mxu0 0
    %678 = vmatpush.bf16.msra.mxu0 0
    %679 = vmatpush.bf16.msra.mxu0 0
    %680 = vmatpush.bf16.msra.mxu0 0
    %681 = vmatpush.bf16.msra.mxu0 0
    %682 = vmatpush.bf16.msra.mxu0 %v673
    %683 = vmatmul.bf16.gmra.mxu0 %v670
    %v684 = vpop.f32.mrf.mxu0
    %v685 = vadd.f32 0.0, %v684
    %v686 = vpop.f32.mrf.mxu0
    %687 = vdwg.mxu0
    %690 = vrot.lane.b32.xlu0 %v380, 8
    %v691 = vpop.permute.xlu0 %690
    %692 = vrot.lane.b32.xlu0 %v401, 8
    %v693 = vpop.permute.xlu0 %692
    %698 = vrot.lane.b32.xlu0 %v522, 16
    %v699 = vpop.permute.xlu0 %698
    %700 = vrot.lane.b32.xlu0 %v543, 16
    %v701 = vpop.permute.xlu0 %700
    %706 = vrot.lane.b32.xlu0 %v664, 24
    %v707 = vpop.permute.xlu0 %706
    %708 = vrot.lane.b32.xlu0 %v685, 24
    %v709 = vpop.permute.xlu0 %708
    %v712 = vsel %vm119, %v238, %v691
    %v713 = vsel %vm119, %v259, %v693
    %vm714 = vcmask 130048
    %v715 = vsel %vm714, %v712, %v699
    %v716 = vsel %vm714, %v713, %v701
    %vm717 = vcmask 195584
    %v718 = vsel %vm717, %v715, %v707
    %v719 = vsel %vm717, %v716, %v709
    %v720 = vpack.c.bf16 %v719, %v718
    %v721 = vld [vmem:[#allocation7] sm:$0xf]
    %v722 = vld [vmem:[#allocation7 + $0x4] sm:$0xf]
    %v723 = vld [vmem:[#allocation7 + $0x8] sm:$0xf]
    %v724 = vld [vmem:[#allocation7 + $0xc] sm:$0xf]
    %v725 = vld [vmem:[%s3] sm:$0x1]
    %v727 = vperm.slane %v725, 0
    %v733 = vunpack.c.l.b16 %v721
    %v734 = vunpack.c.l.b16 %v722
    %v735 = vunpack.c.l.b16 %v723
    %v736 = vunpack.c.l.b16 %v724
    %v737 = vpack.c.b16 %v734, %v733
    %v738 = vpack.c.b16 %v736, %v735
    %v742 = vsel %vm89, %v720, 0
    %744 = vmatpush.bf16.msra.mxu0 0
    %745 = vmatpush.bf16.msra.mxu0 0
    %746 = vmatpush.bf16.msra.mxu0 0
    %747 = vmatpush.bf16.msra.mxu0 0
    %748 = vmatpush.bf16.msra.mxu0 0
    %749 = vmatpush.bf16.msra.mxu0 0
    %750 = vmatpush.bf16.msra.mxu0 %v738
    %751 = vmatpush.bf16.msra.mxu0 %v737
    %752 = vmatmul.bf16.gmra.mxu0 %v742
    %v753 = vpop.f32.mrf.mxu0
    %v754 = vadd.f32 %v727, %v753
    %v755 = vpop.f32.mrf.mxu0
    %v756 = vadd.f32 %v727, %v755
    %757 = vdwg.mxu0
    %758 = vst [vmem:[#allocation8] sm:$0xff] %v754
    %759 = vst [vmem:[#allocation8 + $0x8] sm:$0xff] %v756
    // Predicated region
    $region30: #{tpu_custom_call.1} parent=1 // pred_check
      _
    $region31: #{tpu_custom_call.1} parent=1 // pred_check_branch
      %761 = sbr.rel (0) target = $region33
    $region32: #{tpu_custom_call.1} parent=1 // pred_region
      %763 = vsyncadd [#allocation4], 0
      %s764 = sshll.u32 [#allocation8], 4
      %s765 = int_to_ptr.vmem [resolvable:$true] %s764
      %s766 = sshll.u32 %s4, 4
      %s767 = int_to_ptr.hbm [resolvable:$true] %s766
      %772 = dma.vmem_to_hbm [thread:$0]  %s765, 256, %s767, [#allocation4], 128, 128, 8
    $region33: #{tpu_custom_call.1} parent=1 // pred_fallthru
      _
    // Predicated region
    $region34: #{tpu_custom_call.1} parent=1 // pred_check
      _
    $region35: #{tpu_custom_call.1} parent=1 // pred_check_branch
      %774 = sbr.rel (0) target = $region37
    $region36: #{tpu_custom_call.1} parent=1 // pred_region
      %776 = dma.done [#allocation4], 256
    $region37: #{tpu_custom_call.1} parent=1 // pred_fallthru
      _
    %777 = vsyncpa [#allocation3], 1
    %778 = vsyncpa [#allocation6], 1
    %779 = vsyncpa [#allocation4], 1

</llo_original>
